<compile_context>
chip_gen: v6e
topology: v6e:2x2x1
jax: 0.10.0
libtpu: 0.0.40
codegen_flags: <defaults>
</compile_context>

<pallas_src>
import jax
import jax.numpy as jnp
from jax.experimental import pallas as pl
from jax.experimental.pallas import tpu as pltpu

_BIG = 1e30  # distance assigned to padded codebook rows (never wins argmin)


def _round_up(x, m):
    return (x + m - 1) // m * m


def _vq_kernel(x_ref, et_ref, e2_ref, eg_ref, q_ref, idx_ref):
    # x_ref:   (TM, Dp)  input rows in dist dtype (bf16 or f32)
    # et_ref:  (Dp, Kp)  codebook transposed, dist dtype       (VMEM resident)
    # e2_ref:  (1, Kp)   ||e||^2 in f32, +BIG on padded rows   (VMEM resident)
    # eg_ref:  (Kp, Dp)  codebook in original dtype for gather (VMEM resident)
    # q_ref:   (TM, Dp)  quantized output
    # idx_ref: (TM, 1)   argmin indices
    xe = jnp.dot(x_ref[...], et_ref[...],
                 preferred_element_type=jnp.float32)            # (TM, Kp) on MXU
    dist = e2_ref[...] - 2.0 * xe                               # ||x||^2 dropped

    kp = dist.shape[1]
    minval = jnp.min(dist, axis=1, keepdims=True)               # (TM, 1)
    lane_iota = jax.lax.broadcasted_iota(jnp.int32, dist.shape, 1)
    # first-index tie-breaking (matches torch.argmin)
    idx = jnp.min(jnp.where(dist <= minval, lane_iota, kp), axis=1, keepdims=True)
    idx_ref[...] = idx

    # Gather the selected codebook rows with a one-hot matmul (MXU-friendly).
    onehot = (lane_iota == idx).astype(eg_ref.dtype)
    q_ref[...] = jnp.dot(onehot, eg_ref[...],
                         preferred_element_type=jnp.float32).astype(q_ref.dtype)


def vector_quantize(encoded, embedding, *, tile_rows=1024,
                    dist_dtype=jnp.bfloat16, return_indices=False):
    """Forward pass of VectorQuantizer.

    encoded: (B, T, D); embedding: (K, D).  Returns the (B, T, D) quantized
    values (and (B, T) int32 codebook indices if return_indices=True).

    tile_rows: rows of `encoded` processed per grid step.  Use ~512 on v7x
      (64 MiB VMEM / TensorCore), 1024-2048 on v5e/v6e.
    dist_dtype: dtype fed to the distance matmul.  bf16 is the native MXU dtype
      on v6e/v7x; use jnp.float32 for exact argmin on near-tied codebooks.
    """
    B, T, D = encoded.shape
    K, D2 = embedding.shape
    assert D == D2
    N = B * T

    d_pad = _round_up(D, 128)            # lane-dense stores / MXU-friendly layout
    k_pad = _round_up(K, 128)            # lane-dense distance / argmin tiles
    tm = _round_up(min(tile_rows, N), 8)
    grid = (pl.cdiv(N, tm),)
    n_pad = grid[0] * tm

    x = encoded.reshape(N, D)
    x_p = jnp.pad(x, ((0, n_pad - N), (0, d_pad - D))).astype(dist_dtype)
    e_pad = jnp.pad(embedding, ((0, k_pad - K), (0, d_pad - D)))   # (Kp, Dp) gather copy
    e_t = e_pad.T.astype(dist_dtype)                               # (Dp, Kp) for distances
    e2 = jnp.sum(embedding.astype(jnp.float32) ** 2, axis=1)       # (K,)
    e2 = jnp.pad(e2, (0, k_pad - K), constant_values=_BIG).reshape(1, k_pad)

    quant, idx = pl.pallas_call(
        _vq_kernel,
        out_shape=(jax.ShapeDtypeStruct((n_pad, d_pad), encoded.dtype),
                   jax.ShapeDtypeStruct((n_pad, 1), jnp.int32)),
        grid_spec=pltpu.PrefetchScalarGridSpec(
            num_scalar_prefetch=0,
            grid=grid,
            in_specs=[
                pl.BlockSpec((tm, d_pad), lambda i: (i, 0)),     # x tile (pipelined)
                pl.BlockSpec((d_pad, k_pad), lambda i: (0, 0)),  # e^T   (VMEM resident)
                pl.BlockSpec((1, k_pad), lambda i: (0, 0)),      # ||e||^2 (resident)
                pl.BlockSpec((k_pad, d_pad), lambda i: (0, 0)),  # e for gather (resident)
            ],
            out_specs=[
                pl.BlockSpec((tm, d_pad), lambda i: (i, 0)),
                pl.BlockSpec((tm, 1), lambda i: (i, 0)),
            ]),
        compiler_params=pltpu.CompilerParams(
            dimension_semantics=("parallel",),   # shard row tiles across TCs (v7x)
            vmem_limit_bytes=32 * 1024 * 1024),
    )(x_p, e_t, e2, e_pad)

    q = quant[:N, :D].reshape(B, T, D)
    if return_indices:
        return q, idx[:N, 0].reshape(B, T)
    return q


def _reference(encoded, embedding):
    # Pure-JAX reference mirroring the PyTorch loop semantics.
    B, T, D = encoded.shape
    x = encoded.reshape(B * T, D)
    d = jnp.linalg.norm(x[:, None, :] - embedding[None, :, :], axis=-1)  # (N, K)
    idx = jnp.argmin(d, axis=1)
    return embedding[idx].reshape(B, T, D)


if __name__ == "__main__":
    key = jax.random.PRNGKey(0)
    k_enc, k_emb = jax.random.split(key)

    batch, T, dims = 2, 8, 32
    num_classes = 16

    encoded = jax.random.normal(k_enc, (batch, T, dims), dtype=jnp.float32)
    # nn.Parameter(torch.rand(num_classes, dimensions)) -> uniform [0, 1)
    embedding = jax.random.uniform(k_emb, (num_classes, dims), dtype=jnp.float32)

    # Default path (bf16 distance matmul, the v6e/v7x perf configuration).
    out, idx = vector_quantize(encoded, embedding, return_indices=True)
    out = jax.block_until_ready(out)
    assert out.shape == (batch, T, dims)
    assert idx.shape == (batch, T)

    # Each output row must be the codebook row named by its index ...
    gathered = embedding[idx.reshape(-1)].reshape(out.shape)
    assert jnp.allclose(out, gathered, atol=1e-4), "output is not a codebook row"
    # ... and that code must be a (near-)argmin under exact f32 distances
    # (bf16 distances may only flip genuinely near-tied codes by a tiny margin).
    x_flat = encoded.reshape(-1, dims)
    d2 = jnp.sum((x_flat[:, None, :] - embedding[None, :, :]) ** 2, axis=-1)
    chosen = jnp.take_along_axis(d2, idx.reshape(-1, 1), axis=1)[:, 0]
    assert jnp.all(chosen <= jnp.min(d2, axis=1) * 1.02 + 1e-3), "not a near-argmin"

    # Exact-match path (f32 distances) against the PyTorch-semantics reference.
    out_f32 = vector_quantize(encoded, embedding, dist_dtype=jnp.float32)
    out_f32 = jax.block_until_ready(out_f32)
    ref = _reference(encoded, embedding)
    assert jnp.allclose(out_f32, ref, atol=1e-4), "mismatch vs f32 reference"

    print("KERNEL_OK")
</pallas_src>

<mosaic_0001>
module attributes {stable_mosaic.version = 11 : i64} {
  func.func @_vq_kernel(%arg0: i32, %arg1: memref<16x128xbf16, #tpu.memory_space<vmem>>, %arg2: memref<128x128xbf16, #tpu.memory_space<vmem>>, %arg3: memref<1x128xf32, #tpu.memory_space<vmem>>, %arg4: memref<128x128xf32, #tpu.memory_space<vmem>>, %arg5: memref<16x128xf32, #tpu.memory_space<vmem>>, %arg6: memref<16x1xi32, #tpu.memory_space<vmem>>) attributes {dimension_semantics = [#tpu.dimension_semantics<parallel>], iteration_bounds = array<i64: 1>, scalar_prefetch = 0 : i64, scratch_operands = 0 : i64, tpu.core_type = #tpu.core_type<tc>, window_params = [{transform_indices = @transform_0, window_bounds = array<i64: 16, 128>}, {pipeline_mode = #tpu.pipeline_mode<synchronous>, transform_indices = @transform_1, window_bounds = array<i64: 128, 128>}, {pipeline_mode = #tpu.pipeline_mode<synchronous>, transform_indices = @transform_2, window_bounds = array<i64: 1, 128>}, {pipeline_mode = #tpu.pipeline_mode<synchronous>, transform_indices = @transform_3, window_bounds = array<i64: 128, 128>}, {transform_indices = @transform_4, window_bounds = array<i64: 16, 128>}, {transform_indices = @transform_5, window_bounds = array<i64: 16, 1>}]} {
    %c0 = arith.constant 0 : index
    %c0_0 = arith.constant 0 : index
    %0 = vector.load %arg1[%c0, %c0_0] : memref<16x128xbf16, #tpu.memory_space<vmem>>, vector<16x128xbf16>
    %c0_1 = arith.constant 0 : index
    %c0_2 = arith.constant 0 : index
    %1 = vector.load %arg2[%c0_1, %c0_2] : memref<128x128xbf16, #tpu.memory_space<vmem>>, vector<128x128xbf16>
    %cst = arith.constant dense<0.000000e+00> : vector<16x128xf32>
    %2 = tpu.matmul %0, %1, %cst {dimension_numbers = #tpu.dot_dimension_numbers<[1], [0], [0], [1], [0, 0, 1, 1], [], []>} : vector<16x128xbf16>, vector<128x128xbf16>, vector<16x128xf32> -> vector<16x128xf32>
    %c0_3 = arith.constant 0 : index
    %c0_4 = arith.constant 0 : index
    %3 = vector.load %arg3[%c0_3, %c0_4] : memref<1x128xf32, #tpu.memory_space<vmem>>, vector<1x128xf32>
    %cst_5 = arith.constant 2.000000e+00 : f32
    %4 = vector.broadcast %cst_5 : f32 to vector<16x128xf32>
    %5 = arith.mulf %4, %2 : vector<16x128xf32>
    %6 = vector.broadcast %3 : vector<1x128xf32> to vector<16x128xf32>
    %7 = arith.subf %6, %5 : vector<16x128xf32>
    %cst_6 = arith.constant dense<0x7F800000> : vector<16xf32>
    %8 = vector.multi_reduction <minimumf>, %7, %cst_6 [1] : vector<16x128xf32> to vector<16xf32>
    %9 = vector.shape_cast %8 : vector<16xf32> to vector<16x1xf32>
    %10 = tpu.iota {dimensions = array<i32: 1>} : vector<16x128xi32>
    %11 = vector.broadcast %9 : vector<16x1xf32> to vector<16x128xf32>
    %12 = arith.cmpf ole, %7, %11 : vector<16x128xf32>
    %c128_i32 = arith.constant 128 : i32
    %13 = vector.broadcast %c128_i32 : i32 to vector<16x128xi32>
    %14 = arith.select %12, %10, %13 : vector<16x128xi1>, vector<16x128xi32>
    %cst_7 = arith.constant dense<2147483647> : vector<16xi32>
    %15 = vector.multi_reduction <minsi>, %14, %cst_7 [1] : vector<16x128xi32> to vector<16xi32>
    %16 = vector.shape_cast %15 : vector<16xi32> to vector<16x1xi32>
    %c0_8 = arith.constant 0 : index
    %c0_9 = arith.constant 0 : index
    %17 = vector.load %arg6[%c0_8, %c0_9] : memref<16x1xi32, #tpu.memory_space<vmem>>, vector<16x1xi32>
    tpu.vector_store %arg6[%c0_8, %c0_9], %16 {strides = array<i32>} : memref<16x1xi32, #tpu.memory_space<vmem>>, vector<16x1xi32>,
    %18 = vector.broadcast %16 : vector<16x1xi32> to vector<16x128xi32>
    %19 = arith.cmpi eq, %10, %18 : vector<16x128xi32>
    %20 = arith.extui %19 : vector<16x128xi1> to vector<16x128xi32>
    %21 = arith.sitofp %20 : vector<16x128xi32> to vector<16x128xf32>
    %c0_10 = arith.constant 0 : index
    %c0_11 = arith.constant 0 : index
    %22 = vector.load %arg4[%c0_10, %c0_11] : memref<128x128xf32, #tpu.memory_space<vmem>>, vector<128x128xf32>
    %cst_12 = arith.constant dense<0.000000e+00> : vector<16x128xf32>
    %23 = tpu.matmul %21, %22, %cst_12 {dimension_numbers = #tpu.dot_dimension_numbers<[1], [0], [0], [1], [0, 0, 1, 1], [], []>} : vector<16x128xf32>, vector<128x128xf32>, vector<16x128xf32> -> vector<16x128xf32>
    %c0_13 = arith.constant 0 : index
    %c0_14 = arith.constant 0 : index
    %24 = vector.load %arg5[%c0_13, %c0_14] : memref<16x128xf32, #tpu.memory_space<vmem>>, vector<16x128xf32>
    tpu.vector_store %arg5[%c0_13, %c0_14], %23 {strides = array<i32>} : memref<16x128xf32, #tpu.memory_space<vmem>>, vector<16x128xf32>,
    return
  }
  func.func @transform_0(%arg0: i32) -> (i32, i32) {
    %c0_i32 = arith.constant 0 : i32
    %c0_i32_0 = arith.constant 0 : i32
    return %arg0, %c0_i32 : i32, i32
  }
  func.func @transform_1(%arg0: i32) -> (i32, i32) {
    %c0_i32 = arith.constant 0 : i32
    %c0_i32_0 = arith.constant 0 : i32
    %c0_i32_1 = arith.constant 0 : i32
    return %c0_i32, %c0_i32_0 : i32, i32
  }
  func.func @transform_2(%arg0: i32) -> (i32, i32) {
    %c0_i32 = arith.constant 0 : i32
    %c0_i32_0 = arith.constant 0 : i32
    %c0_i32_1 = arith.constant 0 : i32
    return %c0_i32, %c0_i32_0 : i32, i32
  }
  func.func @transform_3(%arg0: i32) -> (i32, i32) {
    %c0_i32 = arith.constant 0 : i32
    %c0_i32_0 = arith.constant 0 : i32
    %c0_i32_1 = arith.constant 0 : i32
    return %c0_i32, %c0_i32_0 : i32, i32
  }
  func.func @transform_4(%arg0: i32) -> (i32, i32) {
    %c0_i32 = arith.constant 0 : i32
    %c0_i32_0 = arith.constant 0 : i32
    return %arg0, %c0_i32 : i32, i32
  }
  func.func @transform_5(%arg0: i32) -> (i32, i32) {
    %c0_i32 = arith.constant 0 : i32
    %c0_i32_0 = arith.constant 0 : i32
    return %arg0, %c0_i32 : i32, i32
  }
}

</mosaic_0001>

<llo_original>
// kernel: tpu_custom_call.1
$region0: #{tpu_custom_call.1}
  #allocation0 [shape = 'u32[]', space=smem, size = 0x4, offset = 0x4, fixed_abs, tag = 'smem constant byte address 0x4 - core index']
  #allocation1 [shape = 'u32[144,128]{1,0:T(1,128)}', space=vmem, size = 0x12000, scoped, tag = 'internal scratch']
  %s0 = inlined_call_operand.hbm [shape: bf16[16,128], index: 0, kind: input, shape index: {}]
  %s1 = inlined_call_operand.hbm [shape: bf16[128,128], index: 1, kind: input, shape index: {}]
  %s2 = inlined_call_operand.vmem [shape: f32[1,128], index: 2, kind: input, shape index: {}]
  %s3 = inlined_call_operand.hbm [shape: f32[128,128], index: 3, kind: input, shape index: {}]
  %s4 = inlined_call_operand.hbm [shape: f32[16,128], index: 4, kind: output, shape index: {0}]
  %s5 = inlined_call_operand.vmem [shape: s32[16,1], index: 5, kind: output, shape index: {1}]
  %6 = xla_tuple %s4, %s5
  %s7 = sld [smem:[#allocation0]]
  $region46: #{tpu_custom_call.1} parent=0
    _
  %s9 = ssub.s32 1, %s7
  %s10 = scalar_select 0, %s9, %s7
  $region1: #{tpu_custom_call.1} parent=0
    #allocation2 [shape = 'u8[4096]{0}', space=vmem, size = 0x1000, scoped, tag = 'input window, operand 0, single buffered']
    #allocation3 [shape = 's32[1]{0}', space=sflag, size = 0x4, scoped, tag = 'scoped memory for tpu_custom_call.1']
    #allocation4 [shape = 's32[1]{0}', space=sflag, size = 0x4, scoped, tag = 'scoped memory for tpu_custom_call.1']
    #allocation5 [shape = 'u8[32768]{0}', space=vmem, size = 0x8000, scoped, tag = 'input window, operand 1, single buffered']
    #allocation6 [shape = 's32[1]{0}', space=sflag, size = 0x4, scoped, tag = 'scoped memory for tpu_custom_call.1']
    #allocation7 [shape = 'u8[65536]{0}', space=vmem, size = 0x10000, scoped, tag = 'input window, operand 3, single buffered']
    #allocation8 [shape = 'u8[8192]{0}', space=vmem, size = 0x2000, scoped, tag = 'output window, operand 0, single buffered']
    %11 = vsyncpa [#allocation3], 0
    %12 = vsyncpa [#allocation6], 0
    %13 = vsyncpa [#allocation4], 0
    // Predicated region
    $region2: #{tpu_custom_call.1} parent=1 // pred_check
      _
    $region3: #{tpu_custom_call.1} parent=1 // pred_check_branch
      %15 = sbr.rel (0) target = $region5
    $region4: #{tpu_custom_call.1} parent=1 // pred_region
      %s17 = ssub.s32 128, 128
      %18 = vsyncadd [#allocation3], %s17
      %s19 = sshll.u32 [#allocation2], 4
      %s20 = int_to_ptr.vmem [resolvable:$true] %s19
      %25 = dma.hbm_to_vmem [thread:$0]  %s0, 128, %s20, [#allocation3], 64, 64, 4
    $region5: #{tpu_custom_call.1} parent=1 // pred_fallthru
      _
    // Predicated region
    $region6: #{tpu_custom_call.1} parent=1 // pred_check
      _
    $region7: #{tpu_custom_call.1} parent=1 // pred_check_branch
      %27 = sbr.rel (0) target = $region9
    $region8: #{tpu_custom_call.1} parent=1 // pred_region
      %s29 = ssub.s32 1024, 1024
      %30 = vsyncadd [#allocation6], %s29
      %s31 = sshll.u32 [#allocation5], 4
      %s32 = int_to_ptr.vmem [resolvable:$true] %s31
      %37 = dma.hbm_to_vmem [thread:$0]  %s1, 1024, %s32, [#allocation6], 64, 64, 4
    $region9: #{tpu_custom_call.1} parent=1 // pred_fallthru
      _
    // Predicated region
    $region10: #{tpu_custom_call.1} parent=1 // pred_check
      _
    $region11: #{tpu_custom_call.1} parent=1 // pred_check_branch
      %39 = sbr.rel (0) target = $region13
    $region12: #{tpu_custom_call.1} parent=1 // pred_region
      _
    $region13: #{tpu_custom_call.1} parent=1 // pred_fallthru
      _
    // Predicated region
    $region14: #{tpu_custom_call.1} parent=1 // pred_check
      _
    $region15: #{tpu_custom_call.1} parent=1 // pred_check_branch
      %41 = sbr.rel (0) target = $region17
    $region16: #{tpu_custom_call.1} parent=1 // pred_region
      %s43 = ssub.s32 2048, 2048
      %44 = vsyncadd [#allocation6], %s43
      %s45 = sshll.u32 [#allocation7], 4
      %s46 = int_to_ptr.vmem [resolvable:$true] %s45
      %51 = dma.hbm_to_vmem [thread:$0]  %s3, 2048, %s46, [#allocation6], 128, 128, 8
    $region17: #{tpu_custom_call.1} parent=1 // pred_fallthru
      _
    // Predicated region
    $region18: #{tpu_custom_call.1} parent=1 // pred_check
      _
    $region19: #{tpu_custom_call.1} parent=1 // pred_check_branch
      %53 = sbr.rel (0) target = $region21
    $region20: #{tpu_custom_call.1} parent=1 // pred_region
      %54 = dma.done [#allocation3], 128
    $region21: #{tpu_custom_call.1} parent=1 // pred_fallthru
      _
    // Predicated region
    $region22: #{tpu_custom_call.1} parent=1 // pred_check
      _
    $region23: #{tpu_custom_call.1} parent=1 // pred_check_branch
      %56 = sbr.rel (0) target = $region25
    $region24: #{tpu_custom_call.1} parent=1 // pred_region
      %57 = dma.done [#allocation6], 1024
    $region25: #{tpu_custom_call.1} parent=1 // pred_fallthru
      _
    // Predicated region
    $region26: #{tpu_custom_call.1} parent=1 // pred_check
      _
    $region27: #{tpu_custom_call.1} parent=1 // pred_check_branch
      %59 = sbr.rel (0) target = $region29
    $region28: #{tpu_custom_call.1} parent=1 // pred_region
      %60 = dma.done [#allocation6], 2048
    $region29: #{tpu_custom_call.1} parent=1 // pred_fallthru
      _
    %v62 = vld [vmem:[#allocation2] sm:$0xf]
    %v63 = vld [vmem:[#allocation2 + $0x4] sm:$0xf]
    %v64 = vld [vmem:[#allocation5] sm:$0xf]
    %v65 = vld [vmem:[#allocation5 + $0x4] sm:$0xf]
    %v66 = vld [vmem:[#allocation5 + $0x8] sm:$0xf]
    %v67 = vld [vmem:[#allocation5 + $0xc] sm:$0xf]
    %v68 = vld [vmem:[#allocation5 + $0x10] sm:$0xf]
    %v69 = vld [vmem:[#allocation5 + $0x14] sm:$0xf]
    %v70 = vld [vmem:[#allocation5 + $0x18] sm:$0xf]
    %v71 = vld [vmem:[#allocation5 + $0x1c] sm:$0xf]
    %v72 = vld [vmem:[#allocation5 + $0x20] sm:$0xf]
    %v73 = vld [vmem:[#allocation5 + $0x24] sm:$0xf]
    %v74 = vld [vmem:[#allocation5 + $0x28] sm:$0xf]
    %v75 = vld [vmem:[#allocation5 + $0x2c] sm:$0xf]
    %v76 = vld [vmem:[#allocation5 + $0x30] sm:$0xf]
    %v77 = vld [vmem:[#allocation5 + $0x34] sm:$0xf]
    %v78 = vld [vmem:[#allocation5 + $0x38] sm:$0xf]
    %v79 = vld [vmem:[#allocation5 + $0x3c] sm:$0xf]
    %v82 = vunpack.c.l.b16 %v62
    %v83 = vunpack.c.l.b16 %v63
    %v84 = vpack.c.b16 %v83, %v82
    %v102 = vunpack.c.l.b16 %v64
    %v103 = vunpack.c.l.b16 %v65
    %v104 = vunpack.c.l.b16 %v66
    %v105 = vunpack.c.l.b16 %v67
    %v106 = vunpack.c.l.b16 %v68
    %v107 = vunpack.c.l.b16 %v69
    %v108 = vunpack.c.l.b16 %v70
    %v109 = vunpack.c.l.b16 %v71
    %v110 = vunpack.c.l.b16 %v72
    %v111 = vunpack.c.l.b16 %v73
    %v112 = vunpack.c.l.b16 %v74
    %v113 = vunpack.c.l.b16 %v75
    %v114 = vunpack.c.l.b16 %v76
    %v115 = vunpack.c.l.b16 %v77
    %v116 = vunpack.c.l.b16 %v78
    %v117 = vunpack.c.l.b16 %v79
    %v118 = vpack.c.b16 %v103, %v102
    %v119 = vpack.c.b16 %v105, %v104
    %v120 = vpack.c.b16 %v107, %v106
    %v121 = vpack.c.b16 %v109, %v108
    %v122 = vpack.c.b16 %v111, %v110
    %v123 = vpack.c.b16 %v113, %v112
    %v124 = vpack.c.b16 %v115, %v114
    %v125 = vpack.c.b16 %v117, %v116
    %134 = vmatprep.subr.bf16.mxu0 0
    %135 = vmatpush1.bf16.msra.mxu0 %v125
    %136 = vmatprep.subr.bf16.mxu0 0
    %137 = vmatpush1.bf16.msra.mxu0 %v124
    %138 = vmatprep.subr.bf16.mxu0 0
    %139 = vmatpush1.bf16.msra.mxu0 %v123
    %140 = vmatprep.subr.bf16.mxu0 0
    %141 = vmatpush1.bf16.msra.mxu0 %v122
    %142 = vmatprep.subr.bf16.mxu0 0
    %143 = vmatpush1.bf16.msra.mxu0 %v121
    %144 = vmatprep.subr.bf16.mxu0 0
    %145 = vmatpush1.bf16.msra.mxu0 %v120
    %146 = vmatprep.subr.bf16.mxu0 0
    %147 = vmatpush1.bf16.msra.mxu0 %v119
    %148 = vmatprep.subr.bf16.mxu0 0
    %149 = vmatpush1.bf16.msra.mxu0 %v118
    %150 = vmatprep.subr.bf16.mxu0 0
    %151 = vmatpush2.bf16.msra.mxu0 0
    %152 = vmatprep.subr.bf16.mxu0 0
    %153 = vmatpush2.bf16.msra.mxu0 0
    %154 = vmatprep.subr.bf16.mxu0 0
    %155 = vmatpush2.bf16.msra.mxu0 0
    %156 = vmatprep.subr.bf16.mxu0 0
    %157 = vmatpush2.bf16.msra.mxu0 0
    %158 = vmatprep.subr.bf16.mxu0 0
    %159 = vmatpush2.bf16.msra.mxu0 0
    %160 = vmatprep.subr.bf16.mxu0 0
    %161 = vmatpush2.bf16.msra.mxu0 0
    %162 = vmatprep.subr.bf16.mxu0 0
    %163 = vmatpush2.bf16.msra.mxu0 0
    %164 = vmatprep.subr.bf16.mxu0 0
    %165 = vmatpush2.bf16.msra.mxu0 0
    %166 = vmatprep.mubr.bf16.mxu0 0
    %167 = vmatmul.mubr.bf16.gmra.mxu0 %v84
    %v168 = vpop.f32.mrf.mxu0
    %v169 = vadd.f32 0.0, %v168
    %v170 = vpop.f32.mrf.mxu0
    %v171 = vpop.f32.mrf.mxu0
    %v172 = vadd.f32 0.0, %v171
    %v173 = vpop.f32.mrf.mxu0
    %174 = vdwg.mxu0
    %v175 = vld [vmem:[%s2] sm:$0x1]
    %v176 = vmul.f32 %v169, 2.0
    %v177 = vmul.f32 %v172, 2.0
    %v179 = vlaneseq
    %v180 = vshrl.u32 %v179, 7
    %v181 = vsub.s32 0, %v180
    %v182 = vrot.slane %v175, %v181
    %v184 = vsub.f32 %v182, %v176
    %v185 = vsub.f32 %v182, %v177
    %186 = vmin.xlane.f32.xlu0 %v184
    %v187 = vpop.xlane.xlu0 %186
    %188 = vmin.xlane.f32.xlu0 %v185
    %v189 = vpop.xlane.xlu0 %188
    %v190 = vlaneseq
    %v191 = vand.u32 %v190, 127
    %vm192 = vcmp.le.f32.partialorder %v184, %v187
    %vm193 = vcmp.le.f32.partialorder %v185, %v189
    %v194 = vsel %vm192, %v191, 128
    %v195 = vsel %vm193, %v191, 128
    %v196 = vand.u32 %v194, 65535
    %v197 = vshra.s32 %v194, 16
    %v198 = vcvt.s32.f32 %v196
    %v199 = vcvt.s32.f32 %v197
    %200 = vmin.xlane.f32.xlu0 %v199
    %v201 = vpop.xlane.xlu0 %200
    %vm202 = vcmp.eq.f32.partialorder %v199, %v201
    %v203 = vsel %vm202, %v198, inf
    %204 = vmin.xlane.f32.xlu0 %v203
    %v205 = vpop.xlane.xlu0 %204
    %v206 = vcvt.f32.s32 %v205
    %v207 = vcvt.f32.s32 %v201
    %v208 = vshll.u32 %v207, 16
    %v209 = vadd.s32 %v208, %v206
    %v210 = vand.u32 %v195, 65535
    %v211 = vshra.s32 %v195, 16
    %v212 = vcvt.s32.f32 %v210
    %v213 = vcvt.s32.f32 %v211
    %214 = vmin.xlane.f32.xlu0 %v213
    %v215 = vpop.xlane.xlu0 %214
    %vm216 = vcmp.eq.f32.partialorder %v213, %v215
    %v217 = vsel %vm216, %v212, inf
    %218 = vmin.xlane.f32.xlu0 %v217
    %v219 = vpop.xlane.xlu0 %218
    %v220 = vcvt.f32.s32 %v219
    %v221 = vcvt.f32.s32 %v215
    %v222 = vshll.u32 %v221, 16
    %v223 = vadd.s32 %v222, %v220
    %vm224 = vcmask 7168
    %225 = vst.msk [vmem:[%s5] sm:$0xff] %vm224, %v209
    %226 = vst.msk [vmem:[%s5 + $0x8] sm:$0xff] %vm224, %v223
    %vm227 = vcmp.eq.s32.totalorder %v191, %v209
    %vm228 = vcmp.eq.s32.totalorder %v191, %v223
    %v229 = vsel %vm227, 1, 0
    %v230 = vsel %vm228, 1, 0
    %v231 = vcvt.s32.f32 %v229
    %v232 = vcvt.s32.f32 %v230
    %v233 = vld [vmem:[#allocation7] sm:$0xff]
    %v234 = vld [vmem:[#allocation7 + $0x8] sm:$0xff]
    %v235 = vld [vmem:[#allocation7 + $0x10] sm:$0xff]
    %v236 = vld [vmem:[#allocation7 + $0x18] sm:$0xff]
    %v237 = vld [vmem:[#allocation7 + $0x20] sm:$0xff]
    %v238 = vld [vmem:[#allocation7 + $0x28] sm:$0xff]
    %v239 = vld [vmem:[#allocation7 + $0x30] sm:$0xff]
    %v240 = vld [vmem:[#allocation7 + $0x38] sm:$0xff]
    %v241 = vld [vmem:[#allocation7 + $0x40] sm:$0xff]
    %v242 = vld [vmem:[#allocation7 + $0x48] sm:$0xff]
    %v243 = vld [vmem:[#allocation7 + $0x50] sm:$0xff]
    %v244 = vld [vmem:[#allocation7 + $0x58] sm:$0xff]
    %v245 = vld [vmem:[#allocation7 + $0x60] sm:$0xff]
    %v246 = vld [vmem:[#allocation7 + $0x68] sm:$0xff]
    %v247 = vld [vmem:[#allocation7 + $0x70] sm:$0xff]
    %v248 = vld [vmem:[#allocation7 + $0x78] sm:$0xff]
    %249 = vmatprep.subr.mxu0 0.0
    %250 = vmatpush1.msra.mxu0 %v248
    %251 = vmatprep.subr.mxu0 0.0
    %252 = vmatpush1.msra.mxu0 %v247
    %253 = vmatprep.subr.mxu0 0.0
    %254 = vmatpush1.msra.mxu0 %v246
    %255 = vmatprep.subr.mxu0 0.0
    %256 = vmatpush1.msra.mxu0 %v245
    %257 = vmatprep.subr.mxu0 0.0
    %258 = vmatpush1.msra.mxu0 %v244
    %259 = vmatprep.subr.mxu0 0.0
    %260 = vmatpush1.msra.mxu0 %v243
    %261 = vmatprep.subr.mxu0 0.0
    %262 = vmatpush1.msra.mxu0 %v242
    %263 = vmatprep.subr.mxu0 0.0
    %264 = vmatpush1.msra.mxu0 %v241
    %265 = vmatprep.subr.mxu0 0.0
    %266 = vmatpush1.msra.mxu0 %v240
    %267 = vmatprep.subr.mxu0 0.0
    %268 = vmatpush1.msra.mxu0 %v239
    %269 = vmatprep.subr.mxu0 0.0
    %270 = vmatpush1.msra.mxu0 %v238
    %271 = vmatprep.subr.mxu0 0.0
    %272 = vmatpush1.msra.mxu0 %v237
    %273 = vmatprep.subr.mxu0 0.0
    %274 = vmatpush1.msra.mxu0 %v236
    %275 = vmatprep.subr.mxu0 0.0
    %276 = vmatpush1.msra.mxu0 %v235
    %277 = vmatprep.subr.mxu0 0.0
    %278 = vmatpush1.msra.mxu0 %v234
    %279 = vmatprep.subr.mxu0 0.0
    %280 = vmatpush1.msra.mxu0 %v233
    %281 = vmatprep.subr.mxu0 0.0
    %282 = vmatpush2.msra.mxu0 0.0
    %283 = vmatprep.subr.mxu0 0.0
    %284 = vmatpush2.msra.mxu0 0.0
    %285 = vmatprep.subr.mxu0 0.0
    %286 = vmatpush2.msra.mxu0 0.0
    %287 = vmatprep.subr.mxu0 0.0
    %288 = vmatpush2.msra.mxu0 0.0
    %289 = vmatprep.subr.mxu0 0.0
    %290 = vmatpush2.msra.mxu0 0.0
    %291 = vmatprep.subr.mxu0 0.0
    %292 = vmatpush2.msra.mxu0 0.0
    %293 = vmatprep.subr.mxu0 0.0
    %294 = vmatpush2.msra.mxu0 0.0
    %295 = vmatprep.subr.mxu0 0.0
    %296 = vmatpush2.msra.mxu0 0.0
    %297 = vmatprep.subr.mxu0 0.0
    %298 = vmatpush2.msra.mxu0 0.0
    %299 = vmatprep.subr.mxu0 0.0
    %300 = vmatpush2.msra.mxu0 0.0
    %301 = vmatprep.subr.mxu0 0.0
    %302 = vmatpush2.msra.mxu0 0.0
    %303 = vmatprep.subr.mxu0 0.0
    %304 = vmatpush2.msra.mxu0 0.0
    %305 = vmatprep.subr.mxu0 0.0
    %306 = vmatpush2.msra.mxu0 0.0
    %307 = vmatprep.subr.mxu0 0.0
    %308 = vmatpush2.msra.mxu0 0.0
    %309 = vmatprep.subr.mxu0 0.0
    %310 = vmatpush2.msra.mxu0 0.0
    %311 = vmatprep.subr.mxu0 0.0
    %312 = vmatpush2.msra.mxu0 0.0
    %313 = vmatprep.mubr.f32.mxu0 0.0
    %314 = vmatmul.mubr.f32.gmra.mxu0 %v231
    %v315 = vpop.f32.mrf.mxu0
    %v316 = vadd.f32 0.0, %v315
    %v317 = vpop.f32.mrf.mxu0
    %318 = vmatprep.mubr.f32.mxu0 0.0
    %319 = vmatmul.mubr.f32.gmra.mxu0 %v232
    %v320 = vpop.f32.mrf.mxu0
    %v321 = vadd.f32 0.0, %v320
    %v322 = vpop.f32.mrf.mxu0
    %323 = vdwg.mxu0
    %324 = vst [vmem:[#allocation8] sm:$0xff] %v316
    %325 = vst [vmem:[#allocation8 + $0x8] sm:$0xff] %v321
    // Predicated region
    $region30: #{tpu_custom_call.1} parent=1 // pred_check
      _
    $region31: #{tpu_custom_call.1} parent=1 // pred_check_branch
      %327 = sbr.rel (0) target = $region33
    $region32: #{tpu_custom_call.1} parent=1 // pred_region
      %s329 = ssub.s32 256, 256
      %330 = vsyncadd [#allocation4], %s329
      %s331 = sshll.u32 [#allocation8], 4
      %s332 = int_to_ptr.vmem [resolvable:$true] %s331
      %337 = dma.vmem_to_hbm [thread:$0]  %s332, 256, %s4, [#allocation4], 128, 128, 8
    $region33: #{tpu_custom_call.1} parent=1 // pred_fallthru
      _
    // Predicated region
    $region34: #{tpu_custom_call.1} parent=1 // pred_check
      _
    $region35: #{tpu_custom_call.1} parent=1 // pred_check_branch
      %339 = sbr.rel (0) target = $region37
    $region36: #{tpu_custom_call.1} parent=1 // pred_region
      _
    $region37: #{tpu_custom_call.1} parent=1 // pred_fallthru
      _
    // Predicated region
    $region38: #{tpu_custom_call.1} parent=1 // pred_check
      _
    $region39: #{tpu_custom_call.1} parent=1 // pred_check_branch
      %341 = sbr.rel (0) target = $region41
    $region40: #{tpu_custom_call.1} parent=1 // pred_region
      %342 = dma.done [#allocation4], 256
    $region41: #{tpu_custom_call.1} parent=1 // pred_fallthru
      _
    // Predicated region
    $region42: #{tpu_custom_call.1} parent=1 // pred_check
      _
    $region43: #{tpu_custom_call.1} parent=1 // pred_check_branch
      %344 = sbr.rel (0) target = $region45
    $region44: #{tpu_custom_call.1} parent=1 // pred_region
      _
    $region45: #{tpu_custom_call.1} parent=1 // pred_fallthru
      _
    %345 = vsyncpa [#allocation3], 1
    %346 = vsyncpa [#allocation6], 1
    %347 = vsyncpa [#allocation4], 1

</llo_original>
